<compile_context>
chip_gen: v5e
topology: v5e:2x2
jax: 0.10.0
libtpu: 0.0.40
codegen_flags: <defaults>
</compile_context>

<pallas_src>
import functools

import jax
import jax.numpy as jnp
from jax import lax
from jax.experimental import pallas as pl
from jax.experimental.pallas import tpu as pltpu


def _rnn_kernel(x_ref, whx_ref, bhx_ref, whh_ref, bhh_ref, wout_ref, bout_ref,
                out_ref, xw_ref, *, n_steps, batch_p):
    """Single-invocation vanilla-RNN forward.

    x_ref   : (T*Bp, D)   time-major input, batch padded to Bp (sublane mult.)
    whx_ref : (D,  Hp)    Whx^T  (Hp = H rounded up to a lane multiple)
    whh_ref : (Hp, Hp)    Whh^T
    wout_ref: (Hp, Op)    Wout^T
    b*_ref  : (1, Hp/Op)  biases (f32)
    out_ref : (Bp, Op)    output (lane/sublane dense)
    xw_ref  : (T*Bp, Hp)  f32 VMEM scratch: hoisted input projection
    """
    hp = whh_ref.shape[0]
    wdt = whh_ref.dtype

    # Phase 1: one big MXU matmul for the input projection of ALL time steps,
    # with b_hx folded in. Row block [t*Bp, (t+1)*Bp) is time step t.
    xw_ref[...] = (jnp.dot(x_ref[...], whx_ref[...],
                           preferred_element_type=jnp.float32)
                   + bhx_ref[...])

    # Hoist the (1, Hp) -> (Bp, Hp) bias broadcast out of the unrolled loop.
    bhh_b = jnp.broadcast_to(bhh_ref[...], (batch_p, hp))

    # t = 0: no recurrent term and no b_hh (matches the PyTorch loop exactly).
    h0 = jnp.tanh(xw_ref[0:batch_p, :])

    # t = 1 .. T-1: only the (Bp,Hp) x (Hp,Hp) matmul sits on the serial path.
    def step(t, h):
        start = pl.multiple_of(t * batch_p, batch_p)
        xw_t = xw_ref[pl.ds(start, batch_p), :]
        hw = jnp.dot(h.astype(wdt), whh_ref[...],
                     preferred_element_type=jnp.float32)
        return jnp.tanh(xw_t + bhh_b + hw)

    h = lax.fori_loop(1, n_steps, step, h0, unroll=True)

    # Output projection of the final hidden state; (Bp, Op) unmasked store.
    out_ref[...] = (jnp.dot(h.astype(wdt), wout_ref[...],
                            preferred_element_type=jnp.float32)
                    + bout_ref[...]).astype(out_ref.dtype)


def _round_up(n, m):
    return ((n + m - 1) // m) * m


def vanilla_rnn_forward(x, params, *, weight_dtype=jnp.float32):
    """x: [batch, seq, input_dim] float32. Returns [batch, output_dim] f32."""
    whx, bhx, whh, bhh, wout, bout = params
    B, S, D = x.shape
    H = whx.shape[0]
    O = wout.shape[0]
    if S < 2:
        raise ValueError("seq_length must be >= 2 (PyTorch module reads hs[-1]).")
    T = S - 1  # PyTorch loop: range(seq_length - 1)

    # Lane/sublane-dense padded sizes (zero padding keeps the math exact).
    Bp = _round_up(max(B, 8), 8)    # sublane multiple
    Hp = _round_up(H, 128)          # lane multiple (use 256 for large H on v6e/v7x)
    Op = _round_up(O, 128)

    # Time-major, batch-padded, flattened to one (T*Bp, D) slab so the hoisted
    # input projection is a single matmul and every time step is an aligned,
    # contiguous (Bp, Hp) row block of its result.
    x_t = jnp.transpose(x[:, :T, :], (1, 0, 2))            # (T, B, D)
    x_t = jnp.pad(x_t, ((0, 0), (0, Bp - B), (0, 0)))      # (T, Bp, D)
    x2d = x_t.reshape(T * Bp, D).astype(weight_dtype)

    def pad2(w, rows, cols):
        return jnp.pad(w, ((0, rows - w.shape[0]), (0, cols - w.shape[1])))

    whx_p = pad2(whx.T, D, Hp).astype(weight_dtype)        # (D,  Hp)
    whh_p = pad2(whh.T, Hp, Hp).astype(weight_dtype)       # (Hp, Hp)
    wout_p = pad2(wout.T, Hp, Op).astype(weight_dtype)     # (Hp, Op)
    bhx_p = jnp.pad(bhx, (0, Hp - H)).reshape(1, Hp).astype(jnp.float32)
    bhh_p = jnp.pad(bhh, (0, Hp - H)).reshape(1, Hp).astype(jnp.float32)
    bout_p = jnp.pad(bout, (0, Op - O)).reshape(1, Op).astype(jnp.float32)

    kernel = functools.partial(_rnn_kernel, n_steps=T, batch_p=Bp)

    out_padded = pl.pallas_call(
        kernel,
        out_shape=jax.ShapeDtypeStruct((Bp, Op), jnp.float32),
        in_specs=[pl.BlockSpec(memory_space=pltpu.MemorySpace.VMEM)
                  for _ in range(7)],
        out_specs=pl.BlockSpec(memory_space=pltpu.MemorySpace.VMEM),
        scratch_shapes=[pltpu.VMEM((T * Bp, Hp), jnp.float32)],
    )(x2d, whx_p, bhx_p, whh_p, bhh_p, wout_p, bout_p)

    return out_padded[:B, :O]


def init_params(key, input_dim, hidden_dim, output_dim):
    """Deterministic PyTorch-nn.Linear-style init (uniform +-1/sqrt(fan_in))."""
    ks = jax.random.split(key, 6)

    def lin(kw, kb, fan_in, fan_out):
        bound = 1.0 / jnp.sqrt(fan_in)
        w = jax.random.uniform(kw, (fan_out, fan_in), jnp.float32, -bound, bound)
        b = jax.random.uniform(kb, (fan_out,), jnp.float32, -bound, bound)
        return w, b

    whx, bhx = lin(ks[0], ks[1], input_dim, hidden_dim)
    whh, bhh = lin(ks[2], ks[3], hidden_dim, hidden_dim)
    wout, bout = lin(ks[4], ks[5], hidden_dim, output_dim)
    return whx, bhx, whh, bhh, wout, bout


def reference_forward(x, params):
    """Pure-JAX reference matching the PyTorch loop exactly (f32)."""
    whx, bhx, whh, bhh, wout, bout = params
    B, S, D = x.shape
    h = None
    for i in range(S - 1):
        xw = x[:, i, :] @ whx.T + bhx
        if i == 0:
            h = jnp.tanh(xw)
        else:
            h = jnp.tanh(xw + h @ whh.T + bhh)
    return h @ wout.T + bout


if __name__ == "__main__":
    batch, seq_len, input_dim, hidden_dim, output_dim = 2, 8, 16, 32, 4

    key = jax.random.PRNGKey(0)
    kx, kp = jax.random.split(key)
    x = jax.random.normal(kx, (batch, seq_len, input_dim), jnp.float32)
    params = init_params(kp, input_dim, hidden_dim, output_dim)

    ref = reference_forward(x, params)

    # f32 weights: faithful to the PyTorch/f32 reference semantics.
    fwd_f32 = jax.jit(vanilla_rnn_forward)
    out = jax.block_until_ready(fwd_f32(x, params))
    assert out.shape == (batch, output_dim)
    assert jnp.allclose(out, ref, atol=1e-3, rtol=1e-3), (out, ref)

    # bf16 weights + f32 accumulation (review item): mixed-precision path.
    fwd_bf16 = jax.jit(functools.partial(vanilla_rnn_forward,
                                         weight_dtype=jnp.bfloat16))
    out_bf16 = jax.block_until_ready(fwd_bf16(x, params))
    assert out_bf16.shape == (batch, output_dim)
    assert jnp.allclose(out_bf16, ref, atol=5e-2, rtol=5e-2), (out_bf16, ref)

    print("KERNEL_OK")
</pallas_src>

<mosaic_0001>
module attributes {stable_mosaic.version = 11 : i64} {
  func.func @_rnn_kernel(%arg0: memref<56x16xf32, #tpu.memory_space<vmem>>, %arg1: memref<16x128xf32, #tpu.memory_space<vmem>>, %arg2: memref<1x128xf32, #tpu.memory_space<vmem>>, %arg3: memref<128x128xf32, #tpu.memory_space<vmem>>, %arg4: memref<1x128xf32, #tpu.memory_space<vmem>>, %arg5: memref<128x128xf32, #tpu.memory_space<vmem>>, %arg6: memref<1x128xf32, #tpu.memory_space<vmem>>, %arg7: memref<8x128xf32, #tpu.memory_space<vmem>>, %arg8: memref<56x128xf32, #tpu.memory_space<vmem>>) attributes {dimension_semantics = [], scalar_prefetch = 0 : i64, scratch_operands = 1 : i64, tpu.core_type = #tpu.core_type<tc>} {
    %c0 = arith.constant 0 : index
    %c0_0 = arith.constant 0 : index
    %0 = vector.load %arg0[%c0, %c0_0] : memref<56x16xf32, #tpu.memory_space<vmem>>, vector<56x16xf32>
    %c0_1 = arith.constant 0 : index
    %c0_2 = arith.constant 0 : index
    %1 = vector.load %arg1[%c0_1, %c0_2] : memref<16x128xf32, #tpu.memory_space<vmem>>, vector<16x128xf32>
    %cst = arith.constant dense<0.000000e+00> : vector<56x128xf32>
    %2 = tpu.matmul %0, %1, %cst {dimension_numbers = #tpu.dot_dimension_numbers<[1], [0], [0], [1], [0, 0, 1, 1], [], []>} : vector<56x16xf32>, vector<16x128xf32>, vector<56x128xf32> -> vector<56x128xf32>
    %c0_3 = arith.constant 0 : index
    %c0_4 = arith.constant 0 : index
    %3 = vector.load %arg2[%c0_3, %c0_4] : memref<1x128xf32, #tpu.memory_space<vmem>>, vector<1x128xf32>
    %4 = vector.broadcast %3 : vector<1x128xf32> to vector<56x128xf32>
    %5 = arith.addf %2, %4 : vector<56x128xf32>
    %c0_5 = arith.constant 0 : index
    %c0_6 = arith.constant 0 : index
    %6 = vector.load %arg8[%c0_5, %c0_6] : memref<56x128xf32, #tpu.memory_space<vmem>>, vector<56x128xf32>
    tpu.vector_store %arg8[%c0_5, %c0_6], %5 {strides = array<i32>} : memref<56x128xf32, #tpu.memory_space<vmem>>, vector<56x128xf32>,
    %c0_7 = arith.constant 0 : index
    %c0_8 = arith.constant 0 : index
    %7 = vector.load %arg4[%c0_7, %c0_8] : memref<1x128xf32, #tpu.memory_space<vmem>>, vector<1x128xf32>
    %8 = vector.shape_cast %7 : vector<1x128xf32> to vector<1x128xf32>
    %9 = vector.broadcast %8 : vector<1x128xf32> to vector<8x128xf32>
    %c0_9 = arith.constant 0 : index
    %c0_10 = arith.constant 0 : index
    %10 = vector.load %arg8[%c0_9, %c0_10] : memref<56x128xf32, #tpu.memory_space<vmem>>, vector<8x128xf32>
    %11 = math.tanh %10 : vector<8x128xf32>
    %c1_i32 = arith.constant 1 : i32
    %c8_i32 = arith.constant 8 : i32
    %12 = arith.muli %c1_i32, %c8_i32 : i32
    %13 = tpu.assume_multiple %12, 8 : i32
    %14 = arith.index_cast %13 : i32 to index
    %c0_11 = arith.constant 0 : index
    %15 = vector.load %arg8[%14, %c0_11] : memref<56x128xf32, #tpu.memory_space<vmem>>, vector<8x128xf32>
    %c0_12 = arith.constant 0 : index
    %c0_13 = arith.constant 0 : index
    %16 = vector.load %arg3[%c0_12, %c0_13] : memref<128x128xf32, #tpu.memory_space<vmem>>, vector<128x128xf32>
    %cst_14 = arith.constant dense<0.000000e+00> : vector<8x128xf32>
    %17 = tpu.matmul %11, %16, %cst_14 {dimension_numbers = #tpu.dot_dimension_numbers<[1], [0], [0], [1], [0, 0, 1, 1], [], []>} : vector<8x128xf32>, vector<128x128xf32>, vector<8x128xf32> -> vector<8x128xf32>
    %18 = arith.addf %15, %9 : vector<8x128xf32>
    %19 = arith.addf %18, %17 : vector<8x128xf32>
    %20 = math.tanh %19 : vector<8x128xf32>
    %c2_i32 = arith.constant 2 : i32
    %c8_i32_15 = arith.constant 8 : i32
    %21 = arith.muli %c2_i32, %c8_i32_15 : i32
    %22 = tpu.assume_multiple %21, 8 : i32
    %23 = arith.index_cast %22 : i32 to index
    %c0_16 = arith.constant 0 : index
    %24 = vector.load %arg8[%23, %c0_16] : memref<56x128xf32, #tpu.memory_space<vmem>>, vector<8x128xf32>
    %c0_17 = arith.constant 0 : index
    %c0_18 = arith.constant 0 : index
    %25 = vector.load %arg3[%c0_17, %c0_18] : memref<128x128xf32, #tpu.memory_space<vmem>>, vector<128x128xf32>
    %cst_19 = arith.constant dense<0.000000e+00> : vector<8x128xf32>
    %26 = tpu.matmul %20, %25, %cst_19 {dimension_numbers = #tpu.dot_dimension_numbers<[1], [0], [0], [1], [0, 0, 1, 1], [], []>} : vector<8x128xf32>, vector<128x128xf32>, vector<8x128xf32> -> vector<8x128xf32>
    %27 = arith.addf %24, %9 : vector<8x128xf32>
    %28 = arith.addf %27, %26 : vector<8x128xf32>
    %29 = math.tanh %28 : vector<8x128xf32>
    %c3_i32 = arith.constant 3 : i32
    %c8_i32_20 = arith.constant 8 : i32
    %30 = arith.muli %c3_i32, %c8_i32_20 : i32
    %31 = tpu.assume_multiple %30, 8 : i32
    %32 = arith.index_cast %31 : i32 to index
    %c0_21 = arith.constant 0 : index
    %33 = vector.load %arg8[%32, %c0_21] : memref<56x128xf32, #tpu.memory_space<vmem>>, vector<8x128xf32>
    %c0_22 = arith.constant 0 : index
    %c0_23 = arith.constant 0 : index
    %34 = vector.load %arg3[%c0_22, %c0_23] : memref<128x128xf32, #tpu.memory_space<vmem>>, vector<128x128xf32>
    %cst_24 = arith.constant dense<0.000000e+00> : vector<8x128xf32>
    %35 = tpu.matmul %29, %34, %cst_24 {dimension_numbers = #tpu.dot_dimension_numbers<[1], [0], [0], [1], [0, 0, 1, 1], [], []>} : vector<8x128xf32>, vector<128x128xf32>, vector<8x128xf32> -> vector<8x128xf32>
    %36 = arith.addf %33, %9 : vector<8x128xf32>
    %37 = arith.addf %36, %35 : vector<8x128xf32>
    %38 = math.tanh %37 : vector<8x128xf32>
    %c4_i32 = arith.constant 4 : i32
    %c8_i32_25 = arith.constant 8 : i32
    %39 = arith.muli %c4_i32, %c8_i32_25 : i32
    %40 = tpu.assume_multiple %39, 8 : i32
    %41 = arith.index_cast %40 : i32 to index
    %c0_26 = arith.constant 0 : index
    %42 = vector.load %arg8[%41, %c0_26] : memref<56x128xf32, #tpu.memory_space<vmem>>, vector<8x128xf32>
    %c0_27 = arith.constant 0 : index
    %c0_28 = arith.constant 0 : index
    %43 = vector.load %arg3[%c0_27, %c0_28] : memref<128x128xf32, #tpu.memory_space<vmem>>, vector<128x128xf32>
    %cst_29 = arith.constant dense<0.000000e+00> : vector<8x128xf32>
    %44 = tpu.matmul %38, %43, %cst_29 {dimension_numbers = #tpu.dot_dimension_numbers<[1], [0], [0], [1], [0, 0, 1, 1], [], []>} : vector<8x128xf32>, vector<128x128xf32>, vector<8x128xf32> -> vector<8x128xf32>
    %45 = arith.addf %42, %9 : vector<8x128xf32>
    %46 = arith.addf %45, %44 : vector<8x128xf32>
    %47 = math.tanh %46 : vector<8x128xf32>
    %c5_i32 = arith.constant 5 : i32
    %c8_i32_30 = arith.constant 8 : i32
    %48 = arith.muli %c5_i32, %c8_i32_30 : i32
    %49 = tpu.assume_multiple %48, 8 : i32
    %50 = arith.index_cast %49 : i32 to index
    %c0_31 = arith.constant 0 : index
    %51 = vector.load %arg8[%50, %c0_31] : memref<56x128xf32, #tpu.memory_space<vmem>>, vector<8x128xf32>
    %c0_32 = arith.constant 0 : index
    %c0_33 = arith.constant 0 : index
    %52 = vector.load %arg3[%c0_32, %c0_33] : memref<128x128xf32, #tpu.memory_space<vmem>>, vector<128x128xf32>
    %cst_34 = arith.constant dense<0.000000e+00> : vector<8x128xf32>
    %53 = tpu.matmul %47, %52, %cst_34 {dimension_numbers = #tpu.dot_dimension_numbers<[1], [0], [0], [1], [0, 0, 1, 1], [], []>} : vector<8x128xf32>, vector<128x128xf32>, vector<8x128xf32> -> vector<8x128xf32>
    %54 = arith.addf %51, %9 : vector<8x128xf32>
    %55 = arith.addf %54, %53 : vector<8x128xf32>
    %56 = math.tanh %55 : vector<8x128xf32>
    %c6_i32 = arith.constant 6 : i32
    %c8_i32_35 = arith.constant 8 : i32
    %57 = arith.muli %c6_i32, %c8_i32_35 : i32
    %58 = tpu.assume_multiple %57, 8 : i32
    %59 = arith.index_cast %58 : i32 to index
    %c0_36 = arith.constant 0 : index
    %60 = vector.load %arg8[%59, %c0_36] : memref<56x128xf32, #tpu.memory_space<vmem>>, vector<8x128xf32>
    %c0_37 = arith.constant 0 : index
    %c0_38 = arith.constant 0 : index
    %61 = vector.load %arg3[%c0_37, %c0_38] : memref<128x128xf32, #tpu.memory_space<vmem>>, vector<128x128xf32>
    %cst_39 = arith.constant dense<0.000000e+00> : vector<8x128xf32>
    %62 = tpu.matmul %56, %61, %cst_39 {dimension_numbers = #tpu.dot_dimension_numbers<[1], [0], [0], [1], [0, 0, 1, 1], [], []>} : vector<8x128xf32>, vector<128x128xf32>, vector<8x128xf32> -> vector<8x128xf32>
    %63 = arith.addf %60, %9 : vector<8x128xf32>
    %64 = arith.addf %63, %62 : vector<8x128xf32>
    %65 = math.tanh %64 : vector<8x128xf32>
    %c6_i32_40 = arith.constant 6 : i32
    %c0_41 = arith.constant 0 : index
    %c0_42 = arith.constant 0 : index
    %66 = vector.load %arg5[%c0_41, %c0_42] : memref<128x128xf32, #tpu.memory_space<vmem>>, vector<128x128xf32>
    %cst_43 = arith.constant dense<0.000000e+00> : vector<8x128xf32>
    %67 = tpu.matmul %65, %66, %cst_43 {dimension_numbers = #tpu.dot_dimension_numbers<[1], [0], [0], [1], [0, 0, 1, 1], [], []>} : vector<8x128xf32>, vector<128x128xf32>, vector<8x128xf32> -> vector<8x128xf32>
    %c0_44 = arith.constant 0 : index
    %c0_45 = arith.constant 0 : index
    %68 = vector.load %arg6[%c0_44, %c0_45] : memref<1x128xf32, #tpu.memory_space<vmem>>, vector<1x128xf32>
    %69 = vector.broadcast %68 : vector<1x128xf32> to vector<8x128xf32>
    %70 = arith.addf %67, %69 : vector<8x128xf32>
    %c0_46 = arith.constant 0 : index
    %c0_47 = arith.constant 0 : index
    %71 = vector.load %arg7[%c0_46, %c0_47] : memref<8x128xf32, #tpu.memory_space<vmem>>, vector<8x128xf32>
    tpu.vector_store %arg7[%c0_46, %c0_47], %70 {strides = array<i32>} : memref<8x128xf32, #tpu.memory_space<vmem>>, vector<8x128xf32>,
    return
  }
}

</mosaic_0001>

<llo_original>
// kernel: vanilla_rnn_forward.1
$region0: #{vanilla_rnn_forward.1}
  #allocation0 [shape = 'u32[]', space=smem, size = 0x4, offset = 0x4, fixed_abs, tag = 'smem constant byte address 0x4 - core index']
  #allocation1 [shape = 'u32[72,128]{1,0:T(1,128)}', space=vmem, size = 0x9000, scoped, tag = 'internal scratch']
  #allocation2 [shape = 'f32[56,128]{1,0:T(8,128)}', space=vmem, size = 0x7000, scoped, tag = 'scratch operand']
  %s0 = inlined_call_operand.vmem [shape: f32[56,16], index: 0, kind: input, shape index: {}]
  %s1 = inlined_call_operand.vmem [shape: f32[16,128], index: 1, kind: input, shape index: {}]
  %s2 = inlined_call_operand.vmem [shape: f32[1,128], index: 2, kind: input, shape index: {}]
  %s3 = inlined_call_operand.vmem [shape: f32[128,128], index: 3, kind: input, shape index: {}]
  %s4 = inlined_call_operand.vmem [shape: f32[1,128], index: 4, kind: input, shape index: {}]
  %s5 = inlined_call_operand.vmem [shape: f32[128,128], index: 5, kind: input, shape index: {}]
  %s6 = inlined_call_operand.vmem [shape: f32[1,128], index: 6, kind: input, shape index: {}]
  %s7 = inlined_call_operand.vmem [shape: f32[8,128], index: 7, kind: output, shape index: {}]
  %s8 = sld [smem:[#allocation0]]
  $region38: #{vanilla_rnn_forward.1} parent=0
    _
  %s10 = ssub.s32 1, %s8
  %s11 = scalar_select 0, %s10, %s8
  // Predicated region
  $region2: #{vanilla_rnn_forward.1} parent=0 // pred_check
    _
  $region3: #{vanilla_rnn_forward.1} parent=0 // pred_check_branch
    %13 = sbr.rel (0) target = $region5
  $region4: #{vanilla_rnn_forward.1} parent=0 // pred_region
    _
  $region5: #{vanilla_rnn_forward.1} parent=0 // pred_fallthru
    _
  // Predicated region
  $region6: #{vanilla_rnn_forward.1} parent=0 // pred_check
    _
  $region7: #{vanilla_rnn_forward.1} parent=0 // pred_check_branch
    %15 = sbr.rel (0) target = $region9
  $region8: #{vanilla_rnn_forward.1} parent=0 // pred_region
    _
  $region9: #{vanilla_rnn_forward.1} parent=0 // pred_fallthru
    _
  // Predicated region
  $region10: #{vanilla_rnn_forward.1} parent=0 // pred_check
    _
  $region11: #{vanilla_rnn_forward.1} parent=0 // pred_check_branch
    %17 = sbr.rel (0) target = $region13
  $region12: #{vanilla_rnn_forward.1} parent=0 // pred_region
    _
  $region13: #{vanilla_rnn_forward.1} parent=0 // pred_fallthru
    _
  // Predicated region
  $region14: #{vanilla_rnn_forward.1} parent=0 // pred_check
    _
  $region15: #{vanilla_rnn_forward.1} parent=0 // pred_check_branch
    %19 = sbr.rel (0) target = $region17
  $region16: #{vanilla_rnn_forward.1} parent=0 // pred_region
    _
  $region17: #{vanilla_rnn_forward.1} parent=0 // pred_fallthru
    _
  // Predicated region
  $region18: #{vanilla_rnn_forward.1} parent=0 // pred_check
    _
  $region19: #{vanilla_rnn_forward.1} parent=0 // pred_check_branch
    %21 = sbr.rel (0) target = $region21
  $region20: #{vanilla_rnn_forward.1} parent=0 // pred_region
    _
  $region21: #{vanilla_rnn_forward.1} parent=0 // pred_fallthru
    _
  // Predicated region
  $region22: #{vanilla_rnn_forward.1} parent=0 // pred_check
    _
  $region23: #{vanilla_rnn_forward.1} parent=0 // pred_check_branch
    %23 = sbr.rel (0) target = $region25
  $region24: #{vanilla_rnn_forward.1} parent=0 // pred_region
    _
  $region25: #{vanilla_rnn_forward.1} parent=0 // pred_fallthru
    _
  // Predicated region
  $region26: #{vanilla_rnn_forward.1} parent=0 // pred_check
    _
  $region27: #{vanilla_rnn_forward.1} parent=0 // pred_check_branch
    %25 = sbr.rel (0) target = $region29
  $region28: #{vanilla_rnn_forward.1} parent=0 // pred_region
    _
  $region29: #{vanilla_rnn_forward.1} parent=0 // pred_fallthru
    _
  %v26 = vld [vmem:[%s0] sm:$0xff]
  %v27 = vld [vmem:[%s0 + $0x8] sm:$0xff]
  %v28 = vld [vmem:[%s0 + $0x10] sm:$0xff]
  %v29 = vld [vmem:[%s0 + $0x18] sm:$0xff]
  %v30 = vld [vmem:[%s0 + $0x20] sm:$0xff]
  %v31 = vld [vmem:[%s0 + $0x28] sm:$0xff]
  %v32 = vld [vmem:[%s0 + $0x30] sm:$0xff]
  %v33 = vld [vmem:[%s1] sm:$0xff]
  %v34 = vld [vmem:[%s1 + $0x8] sm:$0xff]
  %v35 = vld [vmem:[%s2] sm:$0x1]
  %v37 = vperm.slane %v35, 0
  %vm39 = vcmask 130048
  %v41 = vsel %vm39, %v26, 0
  %v44 = vsel %vm39, %v27, 0
  %v47 = vsel %vm39, %v28, 0
  %v50 = vsel %vm39, %v29, 0
  %v53 = vsel %vm39, %v30, 0
  %v56 = vsel %vm39, %v31, 0
  %v59 = vsel %vm39, %v32, 0
  %61 = vmatpush.msra.mxu0 0.0
  %62 = vmatpush.msra.mxu0 0.0
  %63 = vmatpush.msra.mxu0 0.0
  %64 = vmatpush.msra.mxu0 0.0
  %65 = vmatpush.msra.mxu0 0.0
  %66 = vmatpush.msra.mxu0 0.0
  %67 = vmatpush.msra.mxu0 0.0
  %68 = vmatpush.msra.mxu0 0.0
  %69 = vmatpush.msra.mxu0 0.0
  %70 = vmatpush.msra.mxu0 0.0
  %71 = vmatpush.msra.mxu0 0.0
  %72 = vmatpush.msra.mxu0 0.0
  %73 = vmatpush.msra.mxu0 0.0
  %74 = vmatpush.msra.mxu0 0.0
  %75 = vmatpush.msra.mxu0 %v34
  %76 = vmatpush.msra.mxu0 %v33
  %77 = vmatmul.f32.gmra.mxu0 %v41
  %v78 = vpop.f32.mrf.mxu0
  %v79 = vadd.f32 %v37, %v78
  %80 = vmatmul.f32.gmra.mxu0 %v44
  %v81 = vpop.f32.mrf.mxu0
  %v82 = vadd.f32 %v37, %v81
  %83 = vmatmul.f32.gmra.mxu0 %v47
  %v84 = vpop.f32.mrf.mxu0
  %v85 = vadd.f32 %v37, %v84
  %86 = vmatmul.f32.gmra.mxu0 %v50
  %v87 = vpop.f32.mrf.mxu0
  %v88 = vadd.f32 %v37, %v87
  %89 = vmatmul.f32.gmra.mxu0 %v53
  %v90 = vpop.f32.mrf.mxu0
  %v91 = vadd.f32 %v37, %v90
  %92 = vmatmul.f32.gmra.mxu0 %v56
  %v93 = vpop.f32.mrf.mxu0
  %v94 = vadd.f32 %v37, %v93
  %95 = vmatmul.f32.gmra.mxu0 %v59
  %v96 = vpop.f32.mrf.mxu0
  %v97 = vadd.f32 %v37, %v96
  %98 = vdwg.mxu0
  %99 = vst [vmem:[#allocation2] sm:$0xff] %v79
  %100 = vst [vmem:[#allocation2 + $0x8] sm:$0xff] %v82
  %101 = vst [vmem:[#allocation2 + $0x10] sm:$0xff] %v85
  %102 = vst [vmem:[#allocation2 + $0x18] sm:$0xff] %v88
  %103 = vst [vmem:[#allocation2 + $0x20] sm:$0xff] %v91
  %104 = vst [vmem:[#allocation2 + $0x28] sm:$0xff] %v94
  %105 = vst [vmem:[#allocation2 + $0x30] sm:$0xff] %v97
  %v106 = vld [vmem:[%s4] sm:$0x1]
  %v108 = vperm.slane %v106, 0
  %v110 = vld [vmem:[#allocation2] sm:$0xff]
  %v111 = vtanh.pop %v110
  %s112 = scalar_lea.vmem [#allocation2], 8
  %v113 = vld [vmem:[%s112] sm:$0xff]
  %v114 = vld [vmem:[%s3] sm:$0xff]
  %v115 = vld [vmem:[%s3 + $0x8] sm:$0xff]
  %v116 = vld [vmem:[%s3 + $0x10] sm:$0xff]
  %v117 = vld [vmem:[%s3 + $0x18] sm:$0xff]
  %v118 = vld [vmem:[%s3 + $0x20] sm:$0xff]
  %v119 = vld [vmem:[%s3 + $0x28] sm:$0xff]
  %v120 = vld [vmem:[%s3 + $0x30] sm:$0xff]
  %v121 = vld [vmem:[%s3 + $0x38] sm:$0xff]
  %v122 = vld [vmem:[%s3 + $0x40] sm:$0xff]
  %v123 = vld [vmem:[%s3 + $0x48] sm:$0xff]
  %v124 = vld [vmem:[%s3 + $0x50] sm:$0xff]
  %v125 = vld [vmem:[%s3 + $0x58] sm:$0xff]
  %v126 = vld [vmem:[%s3 + $0x60] sm:$0xff]
  %v127 = vld [vmem:[%s3 + $0x68] sm:$0xff]
  %v128 = vld [vmem:[%s3 + $0x70] sm:$0xff]
  %v129 = vld [vmem:[%s3 + $0x78] sm:$0xff]
  %130 = vmatpush.msra.mxu0 %v129
  %131 = vmatpush.msra.mxu0 %v128
  %132 = vmatpush.msra.mxu0 %v127
  %133 = vmatpush.msra.mxu0 %v126
  %134 = vmatpush.msra.mxu0 %v125
  %135 = vmatpush.msra.mxu0 %v124
  %136 = vmatpush.msra.mxu0 %v123
  %137 = vmatpush.msra.mxu0 %v122
  %138 = vmatpush.msra.mxu0 %v121
  %139 = vmatpush.msra.mxu0 %v120
  %140 = vmatpush.msra.mxu0 %v119
  %141 = vmatpush.msra.mxu0 %v118
  %142 = vmatpush.msra.mxu0 %v117
  %143 = vmatpush.msra.mxu0 %v116
  %144 = vmatpush.msra.mxu0 %v115
  %145 = vmatpush.msra.mxu0 %v114
  %146 = vmatmul.f32.gmra.mxu0 %v111
  %v147 = vpop.f32.mrf.mxu0
  %v148 = vadd.f32 0.0, %v147
  %149 = vdwg.mxu0
  %v150 = vadd.f32 %v113, %v108
  %v151 = vadd.f32 %v150, %v148
  %v152 = vtanh.pop %v151
  %s153 = scalar_lea.vmem [#allocation2], 16
  %v154 = vld [vmem:[%s153] sm:$0xff]
  %155 = vmatpush.msra.mxu0 %v129
  %156 = vmatpush.msra.mxu0 %v128
  %157 = vmatpush.msra.mxu0 %v127
  %158 = vmatpush.msra.mxu0 %v126
  %159 = vmatpush.msra.mxu0 %v125
  %160 = vmatpush.msra.mxu0 %v124
  %161 = vmatpush.msra.mxu0 %v123
  %162 = vmatpush.msra.mxu0 %v122
  %163 = vmatpush.msra.mxu0 %v121
  %164 = vmatpush.msra.mxu0 %v120
  %165 = vmatpush.msra.mxu0 %v119
  %166 = vmatpush.msra.mxu0 %v118
  %167 = vmatpush.msra.mxu0 %v117
  %168 = vmatpush.msra.mxu0 %v116
  %169 = vmatpush.msra.mxu0 %v115
  %170 = vmatpush.msra.mxu0 %v114
  %171 = vmatmul.f32.gmra.mxu0 %v152
  %v172 = vpop.f32.mrf.mxu0
  %v173 = vadd.f32 0.0, %v172
  %174 = vdwg.mxu0
  %v175 = vadd.f32 %v154, %v108
  %v176 = vadd.f32 %v175, %v173
  %v177 = vtanh.pop %v176
  %s178 = scalar_lea.vmem [#allocation2], 24
  %v179 = vld [vmem:[%s178] sm:$0xff]
  %180 = vmatpush.msra.mxu0 %v129
  %181 = vmatpush.msra.mxu0 %v128
  %182 = vmatpush.msra.mxu0 %v127
  %183 = vmatpush.msra.mxu0 %v126
  %184 = vmatpush.msra.mxu0 %v125
  %185 = vmatpush.msra.mxu0 %v124
  %186 = vmatpush.msra.mxu0 %v123
  %187 = vmatpush.msra.mxu0 %v122
  %188 = vmatpush.msra.mxu0 %v121
  %189 = vmatpush.msra.mxu0 %v120
  %190 = vmatpush.msra.mxu0 %v119
  %191 = vmatpush.msra.mxu0 %v118
  %192 = vmatpush.msra.mxu0 %v117
  %193 = vmatpush.msra.mxu0 %v116
  %194 = vmatpush.msra.mxu0 %v115
  %195 = vmatpush.msra.mxu0 %v114
  %196 = vmatmul.f32.gmra.mxu0 %v177
  %v197 = vpop.f32.mrf.mxu0
  %v198 = vadd.f32 0.0, %v197
  %199 = vdwg.mxu0
  %v200 = vadd.f32 %v179, %v108
  %v201 = vadd.f32 %v200, %v198
  %v202 = vtanh.pop %v201
  %s203 = scalar_lea.vmem [#allocation2], 32
  %v204 = vld [vmem:[%s203] sm:$0xff]
  %205 = vmatpush.msra.mxu0 %v129
  %206 = vmatpush.msra.mxu0 %v128
  %207 = vmatpush.msra.mxu0 %v127
  %208 = vmatpush.msra.mxu0 %v126
  %209 = vmatpush.msra.mxu0 %v125
  %210 = vmatpush.msra.mxu0 %v124
  %211 = vmatpush.msra.mxu0 %v123
  %212 = vmatpush.msra.mxu0 %v122
  %213 = vmatpush.msra.mxu0 %v121
  %214 = vmatpush.msra.mxu0 %v120
  %215 = vmatpush.msra.mxu0 %v119
  %216 = vmatpush.msra.mxu0 %v118
  %217 = vmatpush.msra.mxu0 %v117
  %218 = vmatpush.msra.mxu0 %v116
  %219 = vmatpush.msra.mxu0 %v115
  %220 = vmatpush.msra.mxu0 %v114
  %221 = vmatmul.f32.gmra.mxu0 %v202
  %v222 = vpop.f32.mrf.mxu0
  %v223 = vadd.f32 0.0, %v222
  %224 = vdwg.mxu0
  %v225 = vadd.f32 %v204, %v108
  %v226 = vadd.f32 %v225, %v223
  %v227 = vtanh.pop %v226
  %s228 = scalar_lea.vmem [#allocation2], 40
  %v229 = vld [vmem:[%s228] sm:$0xff]
  %230 = vmatpush.msra.mxu0 %v129
  %231 = vmatpush.msra.mxu0 %v128
  %232 = vmatpush.msra.mxu0 %v127
  %233 = vmatpush.msra.mxu0 %v126
  %234 = vmatpush.msra.mxu0 %v125
  %235 = vmatpush.msra.mxu0 %v124
  %236 = vmatpush.msra.mxu0 %v123
  %237 = vmatpush.msra.mxu0 %v122
  %238 = vmatpush.msra.mxu0 %v121
  %239 = vmatpush.msra.mxu0 %v120
  %240 = vmatpush.msra.mxu0 %v119
  %241 = vmatpush.msra.mxu0 %v118
  %242 = vmatpush.msra.mxu0 %v117
  %243 = vmatpush.msra.mxu0 %v116
  %244 = vmatpush.msra.mxu0 %v115
  %245 = vmatpush.msra.mxu0 %v114
  %246 = vmatmul.f32.gmra.mxu0 %v227
  %v247 = vpop.f32.mrf.mxu0
  %v248 = vadd.f32 0.0, %v247
  %249 = vdwg.mxu0
  %v250 = vadd.f32 %v229, %v108
  %v251 = vadd.f32 %v250, %v248
  %v252 = vtanh.pop %v251
  %s253 = scalar_lea.vmem [#allocation2], 48
  %v254 = vld [vmem:[%s253] sm:$0xff]
  %255 = vmatpush.msra.mxu0 %v129
  %256 = vmatpush.msra.mxu0 %v128
  %257 = vmatpush.msra.mxu0 %v127
  %258 = vmatpush.msra.mxu0 %v126
  %259 = vmatpush.msra.mxu0 %v125
  %260 = vmatpush.msra.mxu0 %v124
  %261 = vmatpush.msra.mxu0 %v123
  %262 = vmatpush.msra.mxu0 %v122
  %263 = vmatpush.msra.mxu0 %v121
  %264 = vmatpush.msra.mxu0 %v120
  %265 = vmatpush.msra.mxu0 %v119
  %266 = vmatpush.msra.mxu0 %v118
  %267 = vmatpush.msra.mxu0 %v117
  %268 = vmatpush.msra.mxu0 %v116
  %269 = vmatpush.msra.mxu0 %v115
  %270 = vmatpush.msra.mxu0 %v114
  %271 = vmatmul.f32.gmra.mxu0 %v252
  %v272 = vpop.f32.mrf.mxu0
  %v273 = vadd.f32 0.0, %v272
  %274 = vdwg.mxu0
  %v275 = vadd.f32 %v254, %v108
  %v276 = vadd.f32 %v275, %v273
  %v277 = vtanh.pop %v276
  %v278 = vld [vmem:[%s5] sm:$0xff]
  %v279 = vld [vmem:[%s5 + $0x8] sm:$0xff]
  %v280 = vld [vmem:[%s5 + $0x10] sm:$0xff]
  %v281 = vld [vmem:[%s5 + $0x18] sm:$0xff]
  %v282 = vld [vmem:[%s5 + $0x20] sm:$0xff]
  %v283 = vld [vmem:[%s5 + $0x28] sm:$0xff]
  %v284 = vld [vmem:[%s5 + $0x30] sm:$0xff]
  %v285 = vld [vmem:[%s5 + $0x38] sm:$0xff]
  %v286 = vld [vmem:[%s5 + $0x40] sm:$0xff]
  %v287 = vld [vmem:[%s5 + $0x48] sm:$0xff]
  %v288 = vld [vmem:[%s5 + $0x50] sm:$0xff]
  %v289 = vld [vmem:[%s5 + $0x58] sm:$0xff]
  %v290 = vld [vmem:[%s5 + $0x60] sm:$0xff]
  %v291 = vld [vmem:[%s5 + $0x68] sm:$0xff]
  %v292 = vld [vmem:[%s5 + $0x70] sm:$0xff]
  %v293 = vld [vmem:[%s5 + $0x78] sm:$0xff]
  %v294 = vld [vmem:[%s6] sm:$0x1]
  %v296 = vperm.slane %v294, 0
  %298 = vmatpush.msra.mxu0 %v293
  %299 = vmatpush.msra.mxu0 %v292
  %300 = vmatpush.msra.mxu0 %v291
  %301 = vmatpush.msra.mxu0 %v290
  %302 = vmatpush.msra.mxu0 %v289
  %303 = vmatpush.msra.mxu0 %v288
  %304 = vmatpush.msra.mxu0 %v287
  %305 = vmatpush.msra.mxu0 %v286
  %306 = vmatpush.msra.mxu0 %v285
  %307 = vmatpush.msra.mxu0 %v284
  %308 = vmatpush.msra.mxu0 %v283
  %309 = vmatpush.msra.mxu0 %v282
  %310 = vmatpush.msra.mxu0 %v281
  %311 = vmatpush.msra.mxu0 %v280
  %312 = vmatpush.msra.mxu0 %v279
  %313 = vmatpush.msra.mxu0 %v278
  %314 = vmatmul.f32.gmra.mxu0 %v277
  %v315 = vpop.f32.mrf.mxu0
  %v316 = vadd.f32 %v296, %v315
  %317 = vdwg.mxu0
  %318 = vst [vmem:[%s7] sm:$0xff] %v316
  // Predicated region
  $region30: #{vanilla_rnn_forward.1} parent=0 // pred_check
    _
  $region31: #{vanilla_rnn_forward.1} parent=0 // pred_check_branch
    %320 = sbr.rel (0) target = $region33
  $region32: #{vanilla_rnn_forward.1} parent=0 // pred_region
    _
  $region33: #{vanilla_rnn_forward.1} parent=0 // pred_fallthru
    _
  // Predicated region
  $region34: #{vanilla_rnn_forward.1} parent=0 // pred_check
    _
  $region35: #{vanilla_rnn_forward.1} parent=0 // pred_check_branch
    %322 = sbr.rel (0) target = $region37
  $region36: #{vanilla_rnn_forward.1} parent=0 // pred_region
    _
  $region37: #{vanilla_rnn_forward.1} parent=0 // pred_fallthru
    _

</llo_original>
